<compile_context>
chip_gen: v7x
topology: tpu7x:2x2x1
jax: 0.10.0
libtpu: 0.0.40
codegen_flags: <defaults>
</compile_context>

<pallas_src>
import jax
import jax.numpy as jnp
from jax.experimental import pallas as pl
from jax.experimental.pallas import tpu as pltpu


def _round_up(x, m):
    return (x + m - 1) // m * m


def mlp_kernel(x_ref, w1_ref, b1_ref, w2_ref, b2_ref, o_ref):
    # hidden = relu(x @ W1 + b1)   (bf16 operands, f32 accumulate)
    h = jnp.dot(x_ref[...], w1_ref[...], preferred_element_type=jnp.float32)
    h = jnp.maximum(h + b1_ref[...], 0.0)                 # f32 epilogue
    # out = hidden @ W2 + b2       (cast hidden back to bf16 for the MXU)
    o = jnp.dot(h.astype(w2_ref.dtype), w2_ref[...],
                preferred_element_type=jnp.float32)
    o_ref[...] = (o + b2_ref[...]).astype(o_ref.dtype)


def mlp_forward(x, w1, b1, w2, b2, *, tile_n=512):
    """x: any shape, flattened to (-1, 784) like PyTorch's x.view(-1, 784).

    w1: (784, 128), b1: (1, 128), w2: (128, 10), b2: (1, 10)  (f32).
    Returns f32 logits of shape (n, 10).
    """
    x2d = x.reshape(-1, 784)
    n = x2d.shape[0]

    # Row tile: 512 rows for large batches (past the roofline knee, ~0.8 MiB
    # per bf16 buffer -> tiny VMEM footprint even on v7x's 64 MiB), shrunk to a
    # multiple of 8 for small batches.
    tile = min(tile_n, _round_up(n, 8))
    n_pad = _round_up(n, tile)

    # bf16 inputs to the MXU, f32 accumulation inside the kernel.
    x_bf = x2d.astype(jnp.bfloat16)
    if n_pad != n:
        x_bf = jnp.pad(x_bf, ((0, n_pad - n), (0, 0)))
    w1_bf = w1.astype(jnp.bfloat16)
    b1_f32 = b1.astype(jnp.float32)

    # Lane-dense output: pad the 10-wide dim to 128 with exact zeros.
    w2_pad = jnp.pad(w2.astype(jnp.bfloat16), ((0, 0), (0, 128 - 10)))
    b2_pad = jnp.pad(b2.astype(jnp.float32), ((0, 0), (0, 128 - 10)))

    grid = (n_pad // tile,)
    out = pl.pallas_call(
        mlp_kernel,
        out_shape=jax.ShapeDtypeStruct((n_pad, 128), jnp.float32),
        grid_spec=pltpu.PrefetchScalarGridSpec(
            num_scalar_prefetch=0,
            grid=grid,
            in_specs=[
                # x tiles stream through a double-buffered pipeline.
                pl.BlockSpec((tile, 784), lambda i: (i, 0)),
                # Weights/biases: constant index_map -> stay VMEM-resident.
                pl.BlockSpec((784, 128), lambda i: (0, 0)),   # W1 (bf16)
                pl.BlockSpec((1, 128), lambda i: (0, 0)),     # b1 (f32)
                pl.BlockSpec((128, 128), lambda i: (0, 0)),   # W2 padded (bf16)
                pl.BlockSpec((1, 128), lambda i: (0, 0)),     # b2 padded (f32)
            ],
            out_specs=pl.BlockSpec((tile, 128), lambda i: (i, 0)),
        ),
        compiler_params=pltpu.CompilerParams(
            # Independent per-row-block work: "parallel" lets v7x shard grid
            # steps across both TensorCores.
            dimension_semantics=("parallel",),
        ),
    )(x_bf, w1_bf, b1_f32, w2_pad, b2_pad)

    # Strip batch padding and the lane padding of the 10-wide logits.
    return out[:n, :10]


def init_params(key):
    """Deterministic init matching nn.Linear shapes (stored transposed)."""
    k1, k2, k3, k4 = jax.random.split(key, 4)
    # PyTorch default init: U(-1/sqrt(fan_in), 1/sqrt(fan_in))
    lim1 = 1.0 / jnp.sqrt(784.0)
    lim2 = 1.0 / jnp.sqrt(128.0)
    w1 = jax.random.uniform(k1, (784, 128), jnp.float32, -lim1, lim1)
    b1 = jax.random.uniform(k2, (1, 128), jnp.float32, -lim1, lim1)
    w2 = jax.random.uniform(k3, (128, 10), jnp.float32, -lim2, lim2)
    b2 = jax.random.uniform(k4, (1, 10), jnp.float32, -lim2, lim2)
    return w1, b1, w2, b2


def _reference(x, w1, b1, w2, b2):
    x2d = x.reshape(-1, 784)
    return jnp.maximum(x2d @ w1 + b1, 0.0) @ w2 + b2


if __name__ == "__main__":
    key = jax.random.PRNGKey(0)
    kx, kx2, kp = jax.random.split(key, 3)

    w1, b1, w2, b2 = init_params(kp)

    # Small MNIST-like input: batch=2, NCHW (2,1,28,28) -> flattened to (2,784).
    x = jax.random.normal(kx, (2, 1, 28, 28), jnp.float32)
    out = jax.block_until_ready(mlp_forward(x, w1, b1, w2, b2))
    ref = _reference(x, w1, b1, w2, b2)
    assert out.shape == (2, 10)
    # bf16 MXU inputs with f32 accumulation: loose-but-tight-enough tolerance.
    assert jnp.allclose(out, ref, atol=3e-2, rtol=3e-2), (
        f"max abs err {jnp.max(jnp.abs(out - ref))}")

    # Second check with a batch that is not a multiple of the tile size, to
    # exercise the multi-step grid + batch padding path.
    x_big = jax.random.normal(kx2, (600, 784), jnp.float32)
    out_big = jax.block_until_ready(mlp_forward(x_big, w1, b1, w2, b2))
    ref_big = _reference(x_big, w1, b1, w2, b2)
    assert out_big.shape == (600, 10)
    assert jnp.allclose(out_big, ref_big, atol=3e-2, rtol=3e-2), (
        f"max abs err {jnp.max(jnp.abs(out_big - ref_big))}")

    print("KERNEL_OK")
</pallas_src>

<mosaic_0001>
module attributes {stable_mosaic.version = 11 : i64} {
  func.func @mlp_kernel(%arg0: i32, %arg1: memref<8x784xbf16, #tpu.memory_space<vmem>>, %arg2: memref<784x128xbf16, #tpu.memory_space<vmem>>, %arg3: memref<1x128xf32, #tpu.memory_space<vmem>>, %arg4: memref<128x128xbf16, #tpu.memory_space<vmem>>, %arg5: memref<1x128xf32, #tpu.memory_space<vmem>>, %arg6: memref<8x128xf32, #tpu.memory_space<vmem>>) attributes {dimension_semantics = [#tpu.dimension_semantics<parallel>], iteration_bounds = array<i64: 1>, scalar_prefetch = 0 : i64, scratch_operands = 0 : i64, tpu.core_type = #tpu.core_type<tc>, window_params = [{transform_indices = @transform_0, window_bounds = array<i64: 8, 784>}, {pipeline_mode = #tpu.pipeline_mode<synchronous>, transform_indices = @transform_1, window_bounds = array<i64: 784, 128>}, {pipeline_mode = #tpu.pipeline_mode<synchronous>, transform_indices = @transform_2, window_bounds = array<i64: 1, 128>}, {pipeline_mode = #tpu.pipeline_mode<synchronous>, transform_indices = @transform_3, window_bounds = array<i64: 128, 128>}, {pipeline_mode = #tpu.pipeline_mode<synchronous>, transform_indices = @transform_4, window_bounds = array<i64: 1, 128>}, {transform_indices = @transform_5, window_bounds = array<i64: 8, 128>}]} {
    %c0 = arith.constant 0 : index
    %c0_0 = arith.constant 0 : index
    %0 = vector.load %arg1[%c0, %c0_0] : memref<8x784xbf16, #tpu.memory_space<vmem>>, vector<8x784xbf16>
    %c0_1 = arith.constant 0 : index
    %c0_2 = arith.constant 0 : index
    %1 = vector.load %arg2[%c0_1, %c0_2] : memref<784x128xbf16, #tpu.memory_space<vmem>>, vector<784x128xbf16>
    %cst = arith.constant dense<0.000000e+00> : vector<8x128xf32>
    %2 = tpu.matmul %0, %1, %cst {dimension_numbers = #tpu.dot_dimension_numbers<[1], [0], [0], [1], [0, 0, 1, 1], [], []>} : vector<8x784xbf16>, vector<784x128xbf16>, vector<8x128xf32> -> vector<8x128xf32>
    %c0_3 = arith.constant 0 : index
    %c0_4 = arith.constant 0 : index
    %3 = vector.load %arg3[%c0_3, %c0_4] : memref<1x128xf32, #tpu.memory_space<vmem>>, vector<1x128xf32>
    %4 = vector.broadcast %3 : vector<1x128xf32> to vector<8x128xf32>
    %5 = arith.addf %2, %4 : vector<8x128xf32>
    %cst_5 = arith.constant 0.000000e+00 : f32
    %6 = vector.broadcast %cst_5 : f32 to vector<8x128xf32>
    %7 = arith.maximumf %5, %6 : vector<8x128xf32>
    %8 = arith.truncf %7 : vector<8x128xf32> to vector<8x128xbf16>
    %c0_6 = arith.constant 0 : index
    %c0_7 = arith.constant 0 : index
    %9 = vector.load %arg4[%c0_6, %c0_7] : memref<128x128xbf16, #tpu.memory_space<vmem>>, vector<128x128xbf16>
    %cst_8 = arith.constant dense<0.000000e+00> : vector<8x128xf32>
    %10 = tpu.matmul %8, %9, %cst_8 {dimension_numbers = #tpu.dot_dimension_numbers<[1], [0], [0], [1], [0, 0, 1, 1], [], []>} : vector<8x128xbf16>, vector<128x128xbf16>, vector<8x128xf32> -> vector<8x128xf32>
    %c0_9 = arith.constant 0 : index
    %c0_10 = arith.constant 0 : index
    %11 = vector.load %arg5[%c0_9, %c0_10] : memref<1x128xf32, #tpu.memory_space<vmem>>, vector<1x128xf32>
    %12 = vector.broadcast %11 : vector<1x128xf32> to vector<8x128xf32>
    %13 = arith.addf %10, %12 : vector<8x128xf32>
    %c0_11 = arith.constant 0 : index
    %c0_12 = arith.constant 0 : index
    %14 = vector.load %arg6[%c0_11, %c0_12] : memref<8x128xf32, #tpu.memory_space<vmem>>, vector<8x128xf32>
    tpu.vector_store %arg6[%c0_11, %c0_12], %13 {strides = array<i32>} : memref<8x128xf32, #tpu.memory_space<vmem>>, vector<8x128xf32>,
    return
  }
  func.func @transform_0(%arg0: i32) -> (i32, i32) {
    %c0_i32 = arith.constant 0 : i32
    %c0_i32_0 = arith.constant 0 : i32
    return %arg0, %c0_i32 : i32, i32
  }
  func.func @transform_1(%arg0: i32) -> (i32, i32) {
    %c0_i32 = arith.constant 0 : i32
    %c0_i32_0 = arith.constant 0 : i32
    %c0_i32_1 = arith.constant 0 : i32
    return %c0_i32, %c0_i32_0 : i32, i32
  }
  func.func @transform_2(%arg0: i32) -> (i32, i32) {
    %c0_i32 = arith.constant 0 : i32
    %c0_i32_0 = arith.constant 0 : i32
    %c0_i32_1 = arith.constant 0 : i32
    return %c0_i32, %c0_i32_0 : i32, i32
  }
  func.func @transform_3(%arg0: i32) -> (i32, i32) {
    %c0_i32 = arith.constant 0 : i32
    %c0_i32_0 = arith.constant 0 : i32
    %c0_i32_1 = arith.constant 0 : i32
    return %c0_i32, %c0_i32_0 : i32, i32
  }
  func.func @transform_4(%arg0: i32) -> (i32, i32) {
    %c0_i32 = arith.constant 0 : i32
    %c0_i32_0 = arith.constant 0 : i32
    %c0_i32_1 = arith.constant 0 : i32
    return %c0_i32, %c0_i32_0 : i32, i32
  }
  func.func @transform_5(%arg0: i32) -> (i32, i32) {
    %c0_i32 = arith.constant 0 : i32
    %c0_i32_0 = arith.constant 0 : i32
    return %arg0, %c0_i32 : i32, i32
  }
}

</mosaic_0001>

<llo_original>
// kernel: tpu_custom_call.1
$region0: #{tpu_custom_call.1}
  #allocation0 [shape = 'u32[]', space=smem, size = 0x4, offset = 0x4, fixed_abs, tag = 'smem constant byte address 0x4 - core index']
  #allocation1 [shape = 'u32[144,128]{1,0:T(1,128)}', space=vmem, size = 0x12000, scoped, tag = 'internal scratch']
  %s0 = inlined_call_operand.hbm [shape: bf16[8,784], index: 0, kind: input, shape index: {}]
  %s1 = inlined_call_operand.hbm [shape: bf16[784,128], index: 1, kind: input, shape index: {}]
  %s2 = inlined_call_operand.vmem [shape: f32[1,128], index: 2, kind: input, shape index: {}]
  %s3 = inlined_call_operand.hbm [shape: bf16[128,128], index: 3, kind: input, shape index: {}]
  %s4 = inlined_call_operand.vmem [shape: f32[1,128], index: 4, kind: input, shape index: {}]
  %s5 = inlined_call_operand.hbm [shape: f32[8,128], index: 5, kind: output, shape index: {}]
  %s6 = sld [smem:[#allocation0]]
  $region42: #{tpu_custom_call.1} parent=0
    _
  %s8 = ssub.s32 1, %s6
  %s9 = scalar_select 0, %s8, %s6
  $region1: #{tpu_custom_call.1} parent=0
    #allocation2 [shape = 'u8[14336]{0}', space=vmem, size = 0x3800, scoped, tag = 'input window, operand 0, single buffered']
    #allocation3 [shape = 's32[1]{0}', space=sflag, size = 0x4, scoped, tag = 'scoped memory for tpu_custom_call.1']
    #allocation4 [shape = 's32[1]{0}', space=sflag, size = 0x4, scoped, tag = 'scoped memory for tpu_custom_call.1']
    #allocation5 [shape = 'u8[200704]{0}', space=vmem, size = 0x31000, scoped, tag = 'input window, operand 1, single buffered']
    #allocation6 [shape = 's32[1]{0}', space=sflag, size = 0x4, scoped, tag = 'scoped memory for tpu_custom_call.1']
    #allocation7 [shape = 'u8[32768]{0}', space=vmem, size = 0x8000, scoped, tag = 'input window, operand 3, single buffered']
    #allocation8 [shape = 'u8[4096]{0}', space=vmem, size = 0x1000, scoped, tag = 'output window, operand 0, single buffered']
    %10 = vsyncpa [#allocation3], 0
    %11 = vsyncpa [#allocation6], 0
    %12 = vsyncpa [#allocation4], 0
    // Predicated region
    $region2: #{tpu_custom_call.1} parent=1 // pred_check
      _
    $region3: #{tpu_custom_call.1} parent=1 // pred_check_branch
      %14 = sbr.rel (0) target = $region5
    $region4: #{tpu_custom_call.1} parent=1 // pred_region
      %s16 = ssub.s32 448, 448
      %17 = vsyncadd [#allocation3], %s16
      %s19 = sshll.u32 [#allocation2], 4
      %s20 = int_to_ptr.vmem [resolvable:$true] %s19
      %22 = dma.hbm_to_vmem [thread:$0]  %s0, 448, %s20, [#allocation3]
    $region5: #{tpu_custom_call.1} parent=1 // pred_fallthru
      _
    // Predicated region
    $region6: #{tpu_custom_call.1} parent=1 // pred_check
      _
    $region7: #{tpu_custom_call.1} parent=1 // pred_check_branch
      %24 = sbr.rel (0) target = $region9
    $region8: #{tpu_custom_call.1} parent=1 // pred_region
      %s26 = ssub.s32 6272, 6272
      %27 = vsyncadd [#allocation6], %s26
      %s28 = sshll.u32 [#allocation5], 4
      %s29 = int_to_ptr.vmem [resolvable:$true] %s28
      %34 = dma.hbm_to_vmem [thread:$0]  %s1, 6272, %s29, [#allocation6], 64, 64, 4
    $region9: #{tpu_custom_call.1} parent=1 // pred_fallthru
      _
    // Predicated region
    $region10: #{tpu_custom_call.1} parent=1 // pred_check
      _
    $region11: #{tpu_custom_call.1} parent=1 // pred_check_branch
      %36 = sbr.rel (0) target = $region13
    $region12: #{tpu_custom_call.1} parent=1 // pred_region
      _
    $region13: #{tpu_custom_call.1} parent=1 // pred_fallthru
      _
    // Predicated region
    $region14: #{tpu_custom_call.1} parent=1 // pred_check
      _
    $region15: #{tpu_custom_call.1} parent=1 // pred_check_branch
      %38 = sbr.rel (0) target = $region17
    $region16: #{tpu_custom_call.1} parent=1 // pred_region
      %s40 = ssub.s32 1024, 1024
      %41 = vsyncadd [#allocation6], %s40
      %s42 = sshll.u32 [#allocation7], 4
      %s43 = int_to_ptr.vmem [resolvable:$true] %s42
      %48 = dma.hbm_to_vmem [thread:$0]  %s3, 1024, %s43, [#allocation6], 64, 64, 4
    $region17: #{tpu_custom_call.1} parent=1 // pred_fallthru
      _
    // Predicated region
    $region18: #{tpu_custom_call.1} parent=1 // pred_check
      _
    $region19: #{tpu_custom_call.1} parent=1 // pred_check_branch
      %50 = sbr.rel (0) target = $region21
    $region20: #{tpu_custom_call.1} parent=1 // pred_region
      _
    $region21: #{tpu_custom_call.1} parent=1 // pred_fallthru
      _
    // Predicated region
    $region22: #{tpu_custom_call.1} parent=1 // pred_check
      _
    $region23: #{tpu_custom_call.1} parent=1 // pred_check_branch
      %52 = sbr.rel (0) target = $region25
    $region24: #{tpu_custom_call.1} parent=1 // pred_region
      %53 = dma.done [#allocation3], 448
    $region25: #{tpu_custom_call.1} parent=1 // pred_fallthru
      _
    // Predicated region
    $region26: #{tpu_custom_call.1} parent=1 // pred_check
      _
    $region27: #{tpu_custom_call.1} parent=1 // pred_check_branch
      %55 = sbr.rel (0) target = $region29
    $region28: #{tpu_custom_call.1} parent=1 // pred_region
      %56 = dma.done [#allocation6], 6272
    $region29: #{tpu_custom_call.1} parent=1 // pred_fallthru
      _
    // Predicated region
    $region30: #{tpu_custom_call.1} parent=1 // pred_check
      _
    $region31: #{tpu_custom_call.1} parent=1 // pred_check_branch
      %58 = sbr.rel (0) target = $region33
    $region32: #{tpu_custom_call.1} parent=1 // pred_region
      %59 = dma.done [#allocation6], 1024
    $region33: #{tpu_custom_call.1} parent=1 // pred_fallthru
      _
    %v61 = vld [vmem:[#allocation2] sm:$0xff]
    %v62 = vld [vmem:[#allocation2 + $0x8] sm:$0xff]
    %v63 = vld [vmem:[#allocation2 + $0x10] sm:$0xff]
    %v64 = vld [vmem:[#allocation2 + $0x18] sm:$0xf]
    %v65 = vld [vmem:[#allocation5] sm:$0xf]
    %v66 = vld [vmem:[#allocation5 + $0x4] sm:$0xf]
    %v67 = vld [vmem:[#allocation5 + $0x8] sm:$0xf]
    %v68 = vld [vmem:[#allocation5 + $0xc] sm:$0xf]
    %v69 = vld [vmem:[#allocation5 + $0x10] sm:$0xf]
    %v70 = vld [vmem:[#allocation5 + $0x14] sm:$0xf]
    %v71 = vld [vmem:[#allocation5 + $0x18] sm:$0xf]
    %v72 = vld [vmem:[#allocation5 + $0x1c] sm:$0xf]
    %v73 = vld [vmem:[#allocation5 + $0x20] sm:$0xf]
    %v74 = vld [vmem:[#allocation5 + $0x24] sm:$0xf]
    %v75 = vld [vmem:[#allocation5 + $0x28] sm:$0xf]
    %v76 = vld [vmem:[#allocation5 + $0x2c] sm:$0xf]
    %v77 = vld [vmem:[#allocation5 + $0x30] sm:$0xf]
    %v78 = vld [vmem:[#allocation5 + $0x34] sm:$0xf]
    %v79 = vld [vmem:[#allocation5 + $0x38] sm:$0xf]
    %v80 = vld [vmem:[#allocation5 + $0x3c] sm:$0xf]
    %v81 = vld [vmem:[#allocation5 + $0x40] sm:$0xf]
    %v82 = vld [vmem:[#allocation5 + $0x44] sm:$0xf]
    %v83 = vld [vmem:[#allocation5 + $0x48] sm:$0xf]
    %v84 = vld [vmem:[#allocation5 + $0x4c] sm:$0xf]
    %v85 = vld [vmem:[#allocation5 + $0x50] sm:$0xf]
    %v86 = vld [vmem:[#allocation5 + $0x54] sm:$0xf]
    %v87 = vld [vmem:[#allocation5 + $0x58] sm:$0xf]
    %v88 = vld [vmem:[#allocation5 + $0x5c] sm:$0xf]
    %v89 = vld [vmem:[#allocation5 + $0x60] sm:$0xf]
    %v90 = vld [vmem:[#allocation5 + $0x64] sm:$0xf]
    %v91 = vld [vmem:[#allocation5 + $0x68] sm:$0xf]
    %v92 = vld [vmem:[#allocation5 + $0x6c] sm:$0xf]
    %v93 = vld [vmem:[#allocation5 + $0x70] sm:$0xf]
    %v94 = vld [vmem:[#allocation5 + $0x74] sm:$0xf]
    %v95 = vld [vmem:[#allocation5 + $0x78] sm:$0xf]
    %v96 = vld [vmem:[#allocation5 + $0x7c] sm:$0xf]
    %v97 = vld [vmem:[#allocation5 + $0x80] sm:$0xf]
    %v98 = vld [vmem:[#allocation5 + $0x84] sm:$0xf]
    %v99 = vld [vmem:[#allocation5 + $0x88] sm:$0xf]
    %v100 = vld [vmem:[#allocation5 + $0x8c] sm:$0xf]
    %v101 = vld [vmem:[#allocation5 + $0x90] sm:$0xf]
    %v102 = vld [vmem:[#allocation5 + $0x94] sm:$0xf]
    %v103 = vld [vmem:[#allocation5 + $0x98] sm:$0xf]
    %v104 = vld [vmem:[#allocation5 + $0x9c] sm:$0xf]
    %v105 = vld [vmem:[#allocation5 + $0xa0] sm:$0xf]
    %v106 = vld [vmem:[#allocation5 + $0xa4] sm:$0xf]
    %v107 = vld [vmem:[#allocation5 + $0xa8] sm:$0xf]
    %v108 = vld [vmem:[#allocation5 + $0xac] sm:$0xf]
    %v109 = vld [vmem:[#allocation5 + $0xb0] sm:$0xf]
    %v110 = vld [vmem:[#allocation5 + $0xb4] sm:$0xf]
    %v111 = vld [vmem:[#allocation5 + $0xb8] sm:$0xf]
    %v112 = vld [vmem:[#allocation5 + $0xbc] sm:$0xf]
    %v113 = vld [vmem:[#allocation5 + $0xc0] sm:$0xf]
    %v114 = vld [vmem:[#allocation5 + $0xc4] sm:$0xf]
    %v115 = vld [vmem:[#allocation5 + $0xc8] sm:$0xf]
    %v116 = vld [vmem:[#allocation5 + $0xcc] sm:$0xf]
    %v117 = vld [vmem:[#allocation5 + $0xd0] sm:$0xf]
    %v118 = vld [vmem:[#allocation5 + $0xd4] sm:$0xf]
    %v119 = vld [vmem:[#allocation5 + $0xd8] sm:$0xf]
    %v120 = vld [vmem:[#allocation5 + $0xdc] sm:$0xf]
    %v121 = vld [vmem:[#allocation5 + $0xe0] sm:$0xf]
    %v122 = vld [vmem:[#allocation5 + $0xe4] sm:$0xf]
    %v123 = vld [vmem:[#allocation5 + $0xe8] sm:$0xf]
    %v124 = vld [vmem:[#allocation5 + $0xec] sm:$0xf]
    %v125 = vld [vmem:[#allocation5 + $0xf0] sm:$0xf]
    %v126 = vld [vmem:[#allocation5 + $0xf4] sm:$0xf]
    %v127 = vld [vmem:[#allocation5 + $0xf8] sm:$0xf]
    %v128 = vld [vmem:[#allocation5 + $0xfc] sm:$0xf]
    %v129 = vld [vmem:[#allocation5 + $0x100] sm:$0xf]
    %v130 = vld [vmem:[#allocation5 + $0x104] sm:$0xf]
    %v131 = vld [vmem:[#allocation5 + $0x108] sm:$0xf]
    %v132 = vld [vmem:[#allocation5 + $0x10c] sm:$0xf]
    %v133 = vld [vmem:[#allocation5 + $0x110] sm:$0xf]
    %v134 = vld [vmem:[#allocation5 + $0x114] sm:$0xf]
    %v135 = vld [vmem:[#allocation5 + $0x118] sm:$0xf]
    %v136 = vld [vmem:[#allocation5 + $0x11c] sm:$0xf]
    %v137 = vld [vmem:[#allocation5 + $0x120] sm:$0xf]
    %v138 = vld [vmem:[#allocation5 + $0x124] sm:$0xf]
    %v139 = vld [vmem:[#allocation5 + $0x128] sm:$0xf]
    %v140 = vld [vmem:[#allocation5 + $0x12c] sm:$0xf]
    %v141 = vld [vmem:[#allocation5 + $0x130] sm:$0xf]
    %v142 = vld [vmem:[#allocation5 + $0x134] sm:$0xf]
    %v143 = vld [vmem:[#allocation5 + $0x138] sm:$0xf]
    %v144 = vld [vmem:[#allocation5 + $0x13c] sm:$0xf]
    %v145 = vld [vmem:[#allocation5 + $0x140] sm:$0xf]
    %v146 = vld [vmem:[#allocation5 + $0x144] sm:$0xf]
    %v147 = vld [vmem:[#allocation5 + $0x148] sm:$0xf]
    %v148 = vld [vmem:[#allocation5 + $0x14c] sm:$0xf]
    %v149 = vld [vmem:[#allocation5 + $0x150] sm:$0xf]
    %v150 = vld [vmem:[#allocation5 + $0x154] sm:$0xf]
    %v151 = vld [vmem:[#allocation5 + $0x158] sm:$0xf]
    %v152 = vld [vmem:[#allocation5 + $0x15c] sm:$0xf]
    %v153 = vld [vmem:[#allocation5 + $0x160] sm:$0xf]
    %v154 = vld [vmem:[#allocation5 + $0x164] sm:$0xf]
    %v155 = vld [vmem:[#allocation5 + $0x168] sm:$0xf]
    %v156 = vld [vmem:[#allocation5 + $0x16c] sm:$0xf]
    %v157 = vld [vmem:[#allocation5 + $0x170] sm:$0xf]
    %v158 = vld [vmem:[#allocation5 + $0x174] sm:$0xf]
    %v159 = vld [vmem:[#allocation5 + $0x178] sm:$0xf]
    %v160 = vld [vmem:[#allocation5 + $0x17c] sm:$0xf]
    %v161 = vld [vmem:[#allocation5 + $0x180] sm:$0xf]
    %v162 = vld [vmem:[#allocation5 + $0x184] sm:$0xf]
    %v163 = vld [vmem:[%s2] sm:$0x1]
    %v165 = vlaneseq
    %v166 = vshrl.u32 %v165, 7
    %v167 = vsub.s32 0, %v166
    %v168 = vrot.slane %v163, %v167
    %v174 = vunpack.c.l.b16 %v61
    %v175 = vunpack.c.h.b16 %v61
    %v176 = vunpack.c.l.b16 %v62
    %v177 = vunpack.c.h.b16 %v62
    %v178 = vunpack.c.l.b16 %v63
    %v179 = vunpack.c.h.b16 %v63
    %v180 = vunpack.c.l.b16 %v64
    %v181 = vpack.c.b16 %v174, %v174
    %v182 = vpack.c.b16 %v175, %v175
    %v183 = vpack.c.b16 %v176, %v176
    %v184 = vpack.c.b16 %v177, %v177
    %v185 = vpack.c.b16 %v178, %v178
    %v186 = vpack.c.b16 %v179, %v179
    %v187 = vpack.c.b16 %v180, %v180
    %v292 = vunpack.c.l.b16 %v65
    %v293 = vunpack.c.l.b16 %v66
    %v294 = vunpack.c.l.b16 %v67
    %v295 = vunpack.c.l.b16 %v68
    %v296 = vunpack.c.l.b16 %v69
    %v297 = vunpack.c.l.b16 %v70
    %v298 = vunpack.c.l.b16 %v71
    %v299 = vunpack.c.l.b16 %v72
    %v300 = vunpack.c.l.b16 %v73
    %v301 = vunpack.c.l.b16 %v74
    %v302 = vunpack.c.l.b16 %v75
    %v303 = vunpack.c.l.b16 %v76
    %v304 = vunpack.c.l.b16 %v77
    %v305 = vunpack.c.l.b16 %v78
    %v306 = vunpack.c.l.b16 %v79
    %v307 = vunpack.c.l.b16 %v80
    %v308 = vunpack.c.l.b16 %v81
    %v309 = vunpack.c.l.b16 %v82
    %v310 = vunpack.c.l.b16 %v83
    %v311 = vunpack.c.l.b16 %v84
    %v312 = vunpack.c.l.b16 %v85
    %v313 = vunpack.c.l.b16 %v86
    %v314 = vunpack.c.l.b16 %v87
    %v315 = vunpack.c.l.b16 %v88
    %v316 = vunpack.c.l.b16 %v89
    %v317 = vunpack.c.l.b16 %v90
    %v318 = vunpack.c.l.b16 %v91
    %v319 = vunpack.c.l.b16 %v92
    %v320 = vunpack.c.l.b16 %v93
    %v321 = vunpack.c.l.b16 %v94
    %v322 = vunpack.c.l.b16 %v95
    %v323 = vunpack.c.l.b16 %v96
    %v324 = vunpack.c.l.b16 %v97
    %v325 = vunpack.c.l.b16 %v98
    %v326 = vunpack.c.l.b16 %v99
    %v327 = vunpack.c.l.b16 %v100
    %v328 = vunpack.c.l.b16 %v101
    %v329 = vunpack.c.l.b16 %v102
    %v330 = vunpack.c.l.b16 %v103
    %v331 = vunpack.c.l.b16 %v104
    %v332 = vunpack.c.l.b16 %v105
    %v333 = vunpack.c.l.b16 %v106
    %v334 = vunpack.c.l.b16 %v107
    %v335 = vunpack.c.l.b16 %v108
    %v336 = vunpack.c.l.b16 %v109
    %v337 = vunpack.c.l.b16 %v110
    %v338 = vunpack.c.l.b16 %v111
    %v339 = vunpack.c.l.b16 %v112
    %v340 = vunpack.c.l.b16 %v113
    %v341 = vunpack.c.l.b16 %v114
    %v342 = vunpack.c.l.b16 %v115
    %v343 = vunpack.c.l.b16 %v116
    %v344 = vunpack.c.l.b16 %v117
    %v345 = vunpack.c.l.b16 %v118
    %v346 = vunpack.c.l.b16 %v119
    %v347 = vunpack.c.l.b16 %v120
    %v348 = vunpack.c.l.b16 %v121
    %v349 = vunpack.c.l.b16 %v122
    %v350 = vunpack.c.l.b16 %v123
    %v351 = vunpack.c.l.b16 %v124
    %v352 = vunpack.c.l.b16 %v125
    %v353 = vunpack.c.l.b16 %v126
    %v354 = vunpack.c.l.b16 %v127
    %v355 = vunpack.c.l.b16 %v128
    %v356 = vunpack.c.l.b16 %v129
    %v357 = vunpack.c.l.b16 %v130
    %v358 = vunpack.c.l.b16 %v131
    %v359 = vunpack.c.l.b16 %v132
    %v360 = vunpack.c.l.b16 %v133
    %v361 = vunpack.c.l.b16 %v134
    %v362 = vunpack.c.l.b16 %v135
    %v363 = vunpack.c.l.b16 %v136
    %v364 = vunpack.c.l.b16 %v137
    %v365 = vunpack.c.l.b16 %v138
    %v366 = vunpack.c.l.b16 %v139
    %v367 = vunpack.c.l.b16 %v140
    %v368 = vunpack.c.l.b16 %v141
    %v369 = vunpack.c.l.b16 %v142
    %v370 = vunpack.c.l.b16 %v143
    %v371 = vunpack.c.l.b16 %v144
    %v372 = vunpack.c.l.b16 %v145
    %v373 = vunpack.c.l.b16 %v146
    %v374 = vunpack.c.l.b16 %v147
    %v375 = vunpack.c.l.b16 %v148
    %v376 = vunpack.c.l.b16 %v149
    %v377 = vunpack.c.l.b16 %v150
    %v378 = vunpack.c.l.b16 %v151
    %v379 = vunpack.c.l.b16 %v152
    %v380 = vunpack.c.l.b16 %v153
    %v381 = vunpack.c.l.b16 %v154
    %v382 = vunpack.c.l.b16 %v155
    %v383 = vunpack.c.l.b16 %v156
    %v384 = vunpack.c.l.b16 %v157
    %v385 = vunpack.c.l.b16 %v158
    %v386 = vunpack.c.l.b16 %v159
    %v387 = vunpack.c.l.b16 %v160
    %v388 = vunpack.c.l.b16 %v161
    %v389 = vunpack.c.l.b16 %v162
    %v390 = vpack.c.b16 %v293, %v292
    %v391 = vpack.c.b16 %v295, %v294
    %v392 = vpack.c.b16 %v297, %v296
    %v393 = vpack.c.b16 %v299, %v298
    %v394 = vpack.c.b16 %v301, %v300
    %v395 = vpack.c.b16 %v303, %v302
    %v396 = vpack.c.b16 %v305, %v304
    %v397 = vpack.c.b16 %v307, %v306
    %v398 = vpack.c.b16 %v309, %v308
    %v399 = vpack.c.b16 %v311, %v310
    %v400 = vpack.c.b16 %v313, %v312
    %v401 = vpack.c.b16 %v315, %v314
    %v402 = vpack.c.b16 %v317, %v316
    %v403 = vpack.c.b16 %v319, %v318
    %v404 = vpack.c.b16 %v321, %v320
    %v405 = vpack.c.b16 %v323, %v322
    %v406 = vpack.c.b16 %v325, %v324
    %v407 = vpack.c.b16 %v327, %v326
    %v408 = vpack.c.b16 %v329, %v328
    %v409 = vpack.c.b16 %v331, %v330
    %v410 = vpack.c.b16 %v333, %v332
    %v411 = vpack.c.b16 %v335, %v334
    %v412 = vpack.c.b16 %v337, %v336
    %v413 = vpack.c.b16 %v339, %v338
    %v414 = vpack.c.b16 %v341, %v340
    %v415 = vpack.c.b16 %v343, %v342
    %v416 = vpack.c.b16 %v345, %v344
    %v417 = vpack.c.b16 %v347, %v346
    %v418 = vpack.c.b16 %v349, %v348
    %v419 = vpack.c.b16 %v351, %v350
    %v420 = vpack.c.b16 %v353, %v352
    %v421 = vpack.c.b16 %v355, %v354
    %v422 = vpack.c.b16 %v357, %v356
    %v423 = vpack.c.b16 %v359, %v358
    %v424 = vpack.c.b16 %v361, %v360
    %v425 = vpack.c.b16 %v363, %v362
    %v426 = vpack.c.b16 %v365, %v364
    %v427 = vpack.c.b16 %v367, %v366
    %v428 = vpack.c.b16 %v369, %v368
    %v429 = vpack.c.b16 %v371, %v370
    %v430 = vpack.c.b16 %v373, %v372
    %v431 = vpack.c.b16 %v375, %v374
    %v432 = vpack.c.b16 %v377, %v376
    %v433 = vpack.c.b16 %v379, %v378
    %v434 = vpack.c.b16 %v381, %v380
    %v435 = vpack.c.b16 %v383, %v382
    %v436 = vpack.c.b16 %v385, %v384
    %v437 = vpack.c.b16 %v387, %v386
    %v438 = vpack.c.b16 %v389, %v388
    %vm488 = vcmask 130048
    %v490 = vsel %vm488, %v187, 0
    %492 = vmatprep.subr.bf16.mxu0 0
    %493 = vmatpush1.bf16.msra.mxu0 %v390
    %494 = vmatprep.subr.bf16.mxu0 0
    %495 = vmatpush1.bf16.msra.mxu0 %v391
    %496 = vmatprep.subr.bf16.mxu0 0
    %497 = vmatpush1.bf16.msra.mxu0 %v392
    %498 = vmatprep.subr.bf16.mxu0 0
    %499 = vmatpush1.bf16.msra.mxu0 %v393
    %500 = vmatprep.subr.bf16.mxu0 0
    %501 = vmatpush1.bf16.msra.mxu0 %v394
    %502 = vmatprep.subr.bf16.mxu0 0
    %503 = vmatpush1.bf16.msra.mxu0 %v395
    %504 = vmatprep.subr.bf16.mxu0 0
    %505 = vmatpush1.bf16.msra.mxu0 %v396
    %506 = vmatprep.subr.bf16.mxu0 0
    %507 = vmatpush1.bf16.msra.mxu0 %v397
    %508 = vmatprep.subr.bf16.mxu0 0
    %509 = vmatpush1.bf16.msra.mxu0 %v398
    %510 = vmatprep.subr.bf16.mxu0 0
    %511 = vmatpush1.bf16.msra.mxu0 %v399
    %512 = vmatprep.subr.bf16.mxu0 0
    %513 = vmatpush1.bf16.msra.mxu0 %v400
    %514 = vmatprep.subr.bf16.mxu0 0
    %515 = vmatpush1.bf16.msra.mxu0 %v401
    %516 = vmatprep.subr.bf16.mxu0 0
    %517 = vmatpush1.bf16.msra.mxu0 %v402
    %518 = vmatprep.subr.bf16.mxu0 0
    %519 = vmatpush1.bf16.msra.mxu0 %v403
    %520 = vmatprep.subr.bf16.mxu0 0
    %521 = vmatpush1.bf16.msra.mxu0 %v404
    %522 = vmatprep.subr.bf16.mxu0 0
    %523 = vmatpush1.bf16.msra.mxu0 %v405
    %524 = vmatprep.mubr.bf16.mxu0 %v182
    %525 = vmatmul.mubr.bf16.gmra.mrb[0].mxu0 %v181
    %v526 = vpop.f32.mrb[0].mxu0
    %v527 = vadd.f32 %v168, %v526
    %v528 = vpop.f32.mrb[0].mxu0
    %v529 = vpop.f32.mrb[0].mxu0
    %v530 = vpop.f32.mrb[0].mxu0
    %531 = vdwg.mxu0
    %532 = vmatprep.subr.bf16.mxu0 0
    %533 = vmatpush1.bf16.msra.mxu0 %v406
    %534 = vmatprep.subr.bf16.mxu0 0
    %535 = vmatpush1.bf16.msra.mxu0 %v407
    %536 = vmatprep.subr.bf16.mxu0 0
    %537 = vmatpush1.bf16.msra.mxu0 %v408
    %538 = vmatprep.subr.bf16.mxu0 0
    %539 = vmatpush1.bf16.msra.mxu0 %v409
    %540 = vmatprep.subr.bf16.mxu0 0
    %541 = vmatpush1.bf16.msra.mxu0 %v410
    %542 = vmatprep.subr.bf16.mxu0 0
    %543 = vmatpush1.bf16.msra.mxu0 %v411
    %544 = vmatprep.subr.bf16.mxu0 0
    %545 = vmatpush1.bf16.msra.mxu0 %v412
    %546 = vmatprep.subr.bf16.mxu0 0
    %547 = vmatpush1.bf16.msra.mxu0 %v413
    %548 = vmatprep.subr.bf16.mxu0 0
    %549 = vmatpush1.bf16.msra.mxu0 %v414
    %550 = vmatprep.subr.bf16.mxu0 0
    %551 = vmatpush1.bf16.msra.mxu0 %v415
    %552 = vmatprep.subr.bf16.mxu0 0
    %553 = vmatpush1.bf16.msra.mxu0 %v416
    %554 = vmatprep.subr.bf16.mxu0 0
    %555 = vmatpush1.bf16.msra.mxu0 %v417
    %556 = vmatprep.subr.bf16.mxu0 0
    %557 = vmatpush1.bf16.msra.mxu0 %v418
    %558 = vmatprep.subr.bf16.mxu0 0
    %559 = vmatpush1.bf16.msra.mxu0 %v419
    %560 = vmatprep.subr.bf16.mxu0 0
    %561 = vmatpush1.bf16.msra.mxu0 %v420
    %562 = vmatprep.subr.bf16.mxu0 0
    %563 = vmatpush1.bf16.msra.mxu0 %v421
    %564 = vmatprep.mubr.bf16.mxu0 %v184
    %565 = vmatmul.mubr.bf16.gmra.mrb[0].mxu0 %v183
    %v566 = vpop.f32.mrb[0].mxu0
    %v567 = vadd.f32 %v527, %v566
    %v568 = vpop.f32.mrb[0].mxu0
    %v569 = vpop.f32.mrb[0].mxu0
    %v570 = vpop.f32.mrb[0].mxu0
    %571 = vdwg.mxu0
    %572 = vmatprep.subr.bf16.mxu0 0
    %573 = vmatpush1.bf16.msra.mxu0 %v422
    %574 = vmatprep.subr.bf16.mxu0 0
    %575 = vmatpush1.bf16.msra.mxu0 %v423
    %576 = vmatprep.subr.bf16.mxu0 0
    %577 = vmatpush1.bf16.msra.mxu0 %v424
    %578 = vmatprep.subr.bf16.mxu0 0
    %579 = vmatpush1.bf16.msra.mxu0 %v425
    %580 = vmatprep.subr.bf16.mxu0 0
    %581 = vmatpush1.bf16.msra.mxu0 %v426
    %582 = vmatprep.subr.bf16.mxu0 0
    %583 = vmatpush1.bf16.msra.mxu0 %v427
    %584 = vmatprep.subr.bf16.mxu0 0
    %585 = vmatpush1.bf16.msra.mxu0 %v428
    %586 = vmatprep.subr.bf16.mxu0 0
    %587 = vmatpush1.bf16.msra.mxu0 %v429
    %588 = vmatprep.subr.bf16.mxu0 0
    %589 = vmatpush1.bf16.msra.mxu0 %v430
    %590 = vmatprep.subr.bf16.mxu0 0
    %591 = vmatpush1.bf16.msra.mxu0 %v431
    %592 = vmatprep.subr.bf16.mxu0 0
    %593 = vmatpush1.bf16.msra.mxu0 %v432
    %594 = vmatprep.subr.bf16.mxu0 0
    %595 = vmatpush1.bf16.msra.mxu0 %v433
    %596 = vmatprep.subr.bf16.mxu0 0
    %597 = vmatpush1.bf16.msra.mxu0 %v434
    %598 = vmatprep.subr.bf16.mxu0 0
    %599 = vmatpush1.bf16.msra.mxu0 %v435
    %600 = vmatprep.subr.bf16.mxu0 0
    %601 = vmatpush1.bf16.msra.mxu0 %v436
    %602 = vmatprep.subr.bf16.mxu0 0
    %603 = vmatpush1.bf16.msra.mxu0 %v437
    %604 = vmatprep.mubr.bf16.mxu0 %v186
    %605 = vmatmul.mubr.bf16.gmra.mrb[0].mxu0 %v185
    %v606 = vpop.f32.mrb[0].mxu0
    %v607 = vadd.f32 %v567, %v606
    %v608 = vpop.f32.mrb[0].mxu0
    %v609 = vpop.f32.mrb[0].mxu0
    %v610 = vpop.f32.mrb[0].mxu0
    %611 = vdwg.mxu0
    %612 = vmatprep.subr.bf16.mxu0 0
    %613 = vmatpush1.bf16.msra.mxu0 %v438
    %614 = vmatprep.subr.bf16.mxu0 0
    %615 = vmatpush1.bf16.msra.mxu0 0
    %616 = vmatprep.subr.bf16.mxu0 0
    %617 = vmatpush1.bf16.msra.mxu0 0
    %618 = vmatprep.subr.bf16.mxu0 0
    %619 = vmatpush1.bf16.msra.mxu0 0
    %620 = vmatprep.subr.bf16.mxu0 0
    %621 = vmatpush1.bf16.msra.mxu0 0
    %622 = vmatprep.subr.bf16.mxu0 0
    %623 = vmatpush1.bf16.msra.mxu0 0
    %624 = vmatprep.subr.bf16.mxu0 0
    %625 = vmatpush1.bf16.msra.mxu0 0
    %626 = vmatprep.subr.bf16.mxu0 0
    %627 = vmatpush1.bf16.msra.mxu0 0
    %628 = vmatprep.subr.bf16.mxu0 0
    %629 = vmatpush1.bf16.msra.mxu0 0
    %630 = vmatprep.subr.bf16.mxu0 0
    %631 = vmatpush1.bf16.msra.mxu0 0
    %632 = vmatprep.subr.bf16.mxu0 0
    %633 = vmatpush1.bf16.msra.mxu0 0
    %634 = vmatprep.subr.bf16.mxu0 0
    %635 = vmatpush1.bf16.msra.mxu0 0
    %636 = vmatprep.subr.bf16.mxu0 0
    %637 = vmatpush1.bf16.msra.mxu0 0
    %638 = vmatprep.subr.bf16.mxu0 0
    %639 = vmatpush1.bf16.msra.mxu0 0
    %640 = vmatprep.subr.bf16.mxu0 0
    %641 = vmatpush1.bf16.msra.mxu0 0
    %642 = vmatprep.subr.bf16.mxu0 0
    %643 = vmatpush1.bf16.msra.mxu0 0
    %644 = vmatprep.mubr.bf16.mxu0 0
    %645 = vmatmul.mubr.bf16.gmra.mrb[0].mxu0 %v490
    %v646 = vpop.f32.mrb[0].mxu0
    %v647 = vadd.f32 %v607, %v646
    %v648 = vpop.f32.mrb[0].mxu0
    %v649 = vpop.f32.mrb[0].mxu0
    %v650 = vpop.f32.mrb[0].mxu0
    %651 = vdwg.mxu0
    %v652 = vmax.f32 %v647, 0.0
    %v653 = vpack.c.bf16 %v652, %v652
    %v654 = vld [vmem:[#allocation7] sm:$0xf]
    %v655 = vld [vmem:[#allocation7 + $0x4] sm:$0xf]
    %v656 = vld [vmem:[#allocation7 + $0x8] sm:$0xf]
    %v657 = vld [vmem:[#allocation7 + $0xc] sm:$0xf]
    %v658 = vld [vmem:[#allocation7 + $0x10] sm:$0xf]
    %v659 = vld [vmem:[#allocation7 + $0x14] sm:$0xf]
    %v660 = vld [vmem:[#allocation7 + $0x18] sm:$0xf]
    %v661 = vld [vmem:[#allocation7 + $0x1c] sm:$0xf]
    %v662 = vld [vmem:[#allocation7 + $0x20] sm:$0xf]
    %v663 = vld [vmem:[#allocation7 + $0x24] sm:$0xf]
    %v664 = vld [vmem:[#allocation7 + $0x28] sm:$0xf]
    %v665 = vld [vmem:[#allocation7 + $0x2c] sm:$0xf]
    %v666 = vld [vmem:[#allocation7 + $0x30] sm:$0xf]
    %v667 = vld [vmem:[#allocation7 + $0x34] sm:$0xf]
    %v668 = vld [vmem:[#allocation7 + $0x38] sm:$0xf]
    %v669 = vld [vmem:[#allocation7 + $0x3c] sm:$0xf]
    %v670 = vld [vmem:[%s4] sm:$0x1]
    %v672 = vlaneseq
    %v673 = vshrl.u32 %v672, 7
    %v674 = vsub.s32 0, %v673
    %v675 = vrot.slane %v670, %v674
    %v693 = vunpack.c.l.b16 %v654
    %v694 = vunpack.c.l.b16 %v655
    %v695 = vunpack.c.l.b16 %v656
    %v696 = vunpack.c.l.b16 %v657
    %v697 = vunpack.c.l.b16 %v658
    %v698 = vunpack.c.l.b16 %v659
    %v699 = vunpack.c.l.b16 %v660
    %v700 = vunpack.c.l.b16 %v661
    %v701 = vunpack.c.l.b16 %v662
    %v702 = vunpack.c.l.b16 %v663
    %v703 = vunpack.c.l.b16 %v664
    %v704 = vunpack.c.l.b16 %v665
    %v705 = vunpack.c.l.b16 %v666
    %v706 = vunpack.c.l.b16 %v667
    %v707 = vunpack.c.l.b16 %v668
    %v708 = vunpack.c.l.b16 %v669
    %v709 = vpack.c.b16 %v694, %v693
    %v710 = vpack.c.b16 %v696, %v695
    %v711 = vpack.c.b16 %v698, %v697
    %v712 = vpack.c.b16 %v700, %v699
    %v713 = vpack.c.b16 %v702, %v701
    %v714 = vpack.c.b16 %v704, %v703
    %v715 = vpack.c.b16 %v706, %v705
    %v716 = vpack.c.b16 %v708, %v707
    %725 = vmatprep.subr.bf16.mxu0 0
    %726 = vmatpush1.bf16.msra.mxu0 %v709
    %727 = vmatprep.subr.bf16.mxu0 0
    %728 = vmatpush1.bf16.msra.mxu0 %v710
    %729 = vmatprep.subr.bf16.mxu0 0
    %730 = vmatpush1.bf16.msra.mxu0 %v711
    %731 = vmatprep.subr.bf16.mxu0 0
    %732 = vmatpush1.bf16.msra.mxu0 %v712
    %733 = vmatprep.subr.bf16.mxu0 0
    %734 = vmatpush1.bf16.msra.mxu0 %v713
    %735 = vmatprep.subr.bf16.mxu0 0
    %736 = vmatpush1.bf16.msra.mxu0 %v714
    %737 = vmatprep.subr.bf16.mxu0 0
    %738 = vmatpush1.bf16.msra.mxu0 %v715
    %739 = vmatprep.subr.bf16.mxu0 0
    %740 = vmatpush1.bf16.msra.mxu0 %v716
    %741 = vmatprep.subr.bf16.mxu0 0
    %742 = vmatpush1.bf16.msra.mxu0 0
    %743 = vmatprep.subr.bf16.mxu0 0
    %744 = vmatpush1.bf16.msra.mxu0 0
    %745 = vmatprep.subr.bf16.mxu0 0
    %746 = vmatpush1.bf16.msra.mxu0 0
    %747 = vmatprep.subr.bf16.mxu0 0
    %748 = vmatpush1.bf16.msra.mxu0 0
    %749 = vmatprep.subr.bf16.mxu0 0
    %750 = vmatpush1.bf16.msra.mxu0 0
    %751 = vmatprep.subr.bf16.mxu0 0
    %752 = vmatpush1.bf16.msra.mxu0 0
    %753 = vmatprep.subr.bf16.mxu0 0
    %754 = vmatpush1.bf16.msra.mxu0 0
    %755 = vmatprep.subr.bf16.mxu0 0
    %756 = vmatpush1.bf16.msra.mxu0 0
    %757 = vmatprep.mubr.bf16.mxu0 0
    %758 = vmatmul.mubr.bf16.gmra.mrb[0].mxu0 %v653
    %v759 = vpop.f32.mrb[0].mxu0
    %v760 = vadd.f32 %v675, %v759
    %v761 = vpop.f32.mrb[0].mxu0
    %v762 = vpop.f32.mrb[0].mxu0
    %v763 = vpop.f32.mrb[0].mxu0
    %764 = vdwg.mxu0
    %765 = vst [vmem:[#allocation8] sm:$0xff] %v760
    // Predicated region
    $region34: #{tpu_custom_call.1} parent=1 // pred_check
      _
    $region35: #{tpu_custom_call.1} parent=1 // pred_check_branch
      %767 = sbr.rel (0) target = $region37
    $region36: #{tpu_custom_call.1} parent=1 // pred_region
      %s769 = ssub.s32 128, 128
      %770 = vsyncadd [#allocation4], %s769
      %s772 = sshll.u32 [#allocation8], 4
      %s773 = int_to_ptr.vmem [resolvable:$true] %s772
      %775 = dma.vmem_to_hbm [thread:$0]  %s773, 128, %s5, [#allocation4]
    $region37: #{tpu_custom_call.1} parent=1 // pred_fallthru
      _
    // Predicated region
    $region38: #{tpu_custom_call.1} parent=1 // pred_check
      _
    $region39: #{tpu_custom_call.1} parent=1 // pred_check_branch
      %777 = sbr.rel (0) target = $region41
    $region40: #{tpu_custom_call.1} parent=1 // pred_region
      %778 = dma.done [#allocation4], 128
    $region41: #{tpu_custom_call.1} parent=1 // pred_fallthru
      _
    %779 = vsyncpa [#allocation3], 1
    %780 = vsyncpa [#allocation6], 1
    %781 = vsyncpa [#allocation4], 1

</llo_original>
